<compile_context>
chip_gen: v7x
topology: tpu7x:2x2x1
jax: 0.10.0
libtpu: 0.0.40
codegen_flags: <defaults>
</compile_context>

<pallas_src>
import math

import jax
import jax.numpy as jnp
import numpy as np
from jax.experimental import pallas as pl
from jax.experimental.pallas import tpu as pltpu


# --------------------------------------------------------------------------- #
# Kernel body
# --------------------------------------------------------------------------- #
def _make_kernel(multi_tile: bool, pack_out: bool, compute_dtype):
    """Builds the per-grid-step kernel body.

    Refs, in order:
      x_ref                (Bt, tL, C)  current sequence tile
      [xm1_ref, xp1_ref]   (Bt, tL, C)  previous / next sequence tile (only when
                                        the sequence axis is tiled; they supply
                                        the +-1 circular halo rows)
      w_ref                (3C, H)      fused tap weights, tap-major rows (resident)
      pe_ref               (tL, H) or (tL*H/128, 128)  pos-emb with conv bias folded in
      o_ref                (Bt, tL, H) or (Bt, tL*H/128, 128)
    """

    def kernel(*refs):
        if multi_tile:
            x_ref, xm1_ref, xp1_ref, w_ref, pe_ref, o_ref = refs
        else:
            x_ref, w_ref, pe_ref, o_ref = refs
        Bt, tL, C = x_ref.shape
        H = w_ref.shape[1]

        x = x_ref[...]                                      # (Bt, tL, C)
        if multi_tile:
            left = xm1_ref[:, tL - 1:, :]                   # last row of tile j-1
            right = xp1_ref[:, :1, :]                       # first row of tile j+1
        else:
            left = x[:, tL - 1:, :]                         # circular wrap in-tile
            right = x[:, :1, :]
        # Static slices + one sublane concat per shift. (pltpu.roll(x, 1/tL-1,
        # axis=1) is the XLU-slot alternative for the non-haloed case; slices
        # keep a single proven code path for both cases.)
        x_prev = jnp.concatenate([left, x[:, :tL - 1, :]], axis=1)
        x_next = jnp.concatenate([x[:, 1:, :], right], axis=1)

        # All three circular-conv taps fused into ONE MXU matmul:
        # (Bt*tL, 3C) @ (3C, H), bf16 operands / f32 accumulation by default.
        x_cat = jnp.concatenate([x_prev, x, x_next], axis=-1).astype(compute_dtype)
        acc = jnp.dot(x_cat.reshape(Bt * tL, 3 * C), w_ref[...],
                      preferred_element_type=jnp.float32)   # (Bt*tL, H) f32

        pe = pe_ref[...].astype(jnp.float32)                # conv bias already folded in
        if pack_out:
            rows128 = pe_ref.shape[0]
            y = acc.reshape(Bt, rows128, 128) + pe          # lane-dense store layout
        else:
            y = acc.reshape(Bt, tL, H) + pe
        o_ref[...] = y.astype(o_ref.dtype)

    return kernel


# --------------------------------------------------------------------------- #
# Tile planning (generation-aware VMEM budgeting)
# --------------------------------------------------------------------------- #
def _vmem_capacity_bytes(default_bytes: int = 64 << 20) -> int:
    """Physical per-core VMEM (128 MiB v5e/v6e, 64 MiB v7x); safe fallback."""
    try:
        get_info = getattr(pltpu, "get_tpu_info", None)
        if get_info is not None:
            info = get_info()
            for name in ("vmem_capacity_bytes", "vmem_size_bytes", "vmem_bytes"):
                val = getattr(info, name, None)
                if val:
                    return int(val)
    except Exception:
        pass
    return default_bytes


def _divisors_desc(n):
    return [d for d in range(n, 0, -1) if n % d == 0]


def _plan_tiles(B, L, C, H, in_bytes, out_bytes, c_bytes, block_batch, block_len):
    """Pick (Bt, tL, vmem_limit): the biggest tiles that fit the per-generation
    VMEM budget, with >= 2 grid steps whenever possible (v7x has 2 TensorCores)."""
    cap = _vmem_capacity_bytes()
    vmem_limit = max(32 << 20, min((cap * 3) // 4, 96 << 20))

    def n_views(tL):                       # session views per step (halo needs 3)
        return 1 if tL == L else 3

    def row_bytes(tL):                     # per batch row, per grid step
        io = n_views(tL) * 2 * tL * C * in_bytes + 2 * tL * H * out_bytes  # dbl-buffered
        tmp = tL * (8 * C * c_bytes + 8 * H)   # x / x_prev / x_next / x_cat + f32 acc,y
        return io + tmp

    def resident_bytes(tL):                # operands kept across grid steps
        return 2 * (3 * C * H + tL * H) * c_bytes   # w_cat + pe block (worst-case 2x)

    # --- sequence tile -------------------------------------------------------
    if block_len is not None:
        tL = block_len
    else:
        cands = [d for d in _divisors_desc(L) if d == L or d % 8 == 0]
        tL = cands[-1]
        for d in cands:                    # largest tile that fits with Bt=1
            if resident_bytes(d) + row_bytes(d) <= vmem_limit:
                tL = d
                break
    assert L % tL == 0, "block_len must divide the sequence length"
    nL = L // tL

    # --- batch tile ----------------------------------------------------------
    if block_batch is not None:
        Bt = block_batch
    else:
        budget = max(0, vmem_limit - resident_bytes(tL))
        cap_rows = max(1, budget // max(1, row_bytes(tL)))
        cap_rows = min(cap_rows, max(1, 4096 // tL))     # HBM roofline plateaus ~1-4K rows
        if nL == 1 and B >= 2:
            cap_rows = min(cap_rows, B // 2)             # >= 2 grid steps (v7x megacore)
        Bt = 1
        for d in _divisors_desc(B):
            if d <= cap_rows:
                Bt = d
                break
    assert B % Bt == 0, "block_batch must divide the batch size"
    return Bt, tL, vmem_limit


# --------------------------------------------------------------------------- #
# Wrapper
# --------------------------------------------------------------------------- #
def log_encoder_low(session, conv_weight, conv_bias, pe, *,
                    compute_dtype=jnp.bfloat16, out_dtype=None,
                    block_batch=None, block_len=None, pack_output=None):
    """session (B, L, C); conv_weight (H, C, 3); conv_bias (H,); pe (L, H).

    Returns (B, L, H) in `out_dtype` (default: session.dtype). The MXU runs in
    `compute_dtype` (bfloat16 by default, f32 accumulation); pass
    compute_dtype=jnp.float32 for tight parity with the f32 reference.
    """
    B, L, C = session.shape
    H = conv_weight.shape[0]
    out_dtype = session.dtype if out_dtype is None else out_dtype

    in_bytes = jnp.dtype(session.dtype).itemsize
    out_bytes = jnp.dtype(out_dtype).itemsize
    c_bytes = jnp.dtype(compute_dtype).itemsize

    Bt, tL, vmem_limit = _plan_tiles(B, L, C, H, in_bytes, out_bytes, c_bytes,
                                     block_batch, block_len)
    nB, nL = B // Bt, L // tL
    multi_tile = nL > 1
    assert tL == L or tL % 8 == 0, "sequence tile must be a multiple of 8 (or L)"

    # Fused tap weights: (H, C, 3) -> (3, C, H) -> (3C, H); rows [0:C] multiply
    # x[l-1], [C:2C] multiply x[l], [2C:3C] multiply x[l+1]. Resident in VMEM.
    w_cat = jnp.transpose(conv_weight, (2, 1, 0)).reshape(3 * C, H).astype(compute_dtype)
    # Fold the conv bias into the resident positional-embedding operand (f32 math).
    pe_full = pe.astype(jnp.float32) + conv_bias.astype(jnp.float32)[None, :]

    rows128 = (tL * H) // 128 if (tL * H) % 128 == 0 else 0
    can_pack = rows128 > 0 and (rows128 % 8 == 0 or nL == 1)
    want_pack = ((H % 128 != 0) if pack_output is None else bool(pack_output)) and can_pack

    cparams = pltpu.CompilerParams(
        dimension_semantics=("parallel", "parallel"),
        vmem_limit_bytes=int(vmem_limit),
    )

    def _run(pack):
        pe_b = pe_full.reshape((L * H) // 128, 128) if pack else pe_full
        pe_b = pe_b.astype(compute_dtype)
        pe_block = (rows128, 128) if pack else (tL, H)

        in_specs = [pl.BlockSpec((Bt, tL, C), lambda i, j: (i, j, 0))]
        operands = [session]
        if multi_tile:
            # Two extra views of the SAME array supply the +-1 circular halo rows.
            in_specs += [
                pl.BlockSpec((Bt, tL, C), lambda i, j: (i, (j + nL - 1) % nL, 0)),
                pl.BlockSpec((Bt, tL, C), lambda i, j: (i, (j + 1) % nL, 0)),
            ]
            operands += [session, session]
        in_specs += [
            pl.BlockSpec((3 * C, H), lambda i, j: (0, 0)),   # fused weights (resident)
            pl.BlockSpec(pe_block, lambda i, j: (j, 0)),     # pos-emb + bias
        ]
        operands += [w_cat, pe_b]

        if pack:
            out_shape = jax.ShapeDtypeStruct((B, (L * H) // 128, 128), out_dtype)
            out_spec = pl.BlockSpec((Bt, rows128, 128), lambda i, j: (i, j, 0))
        else:
            out_shape = jax.ShapeDtypeStruct((B, L, H), out_dtype)
            out_spec = pl.BlockSpec((Bt, tL, H), lambda i, j: (i, j, 0))

        out = pl.pallas_call(
            _make_kernel(multi_tile, pack, compute_dtype),
            out_shape=out_shape,
            grid=(nB, nL),
            in_specs=in_specs,
            out_specs=out_spec,
            compiler_params=cparams,
        )(*operands)
        return out.reshape(B, L, H) if pack else out

    if want_pack:
        try:
            return _run(True)
        except Exception:
            # Lane-packing the output is a pure layout optimization; fall back to
            # the straightforward (tL, H) store if the shape-cast is rejected.
            return _run(False)
    return _run(False)


# --------------------------------------------------------------------------- #
# Reference / helpers
# --------------------------------------------------------------------------- #
def make_positional_embedding(L, H):
    # Matches PositionalEmbedding: pe[:, 0::2]=sin(pos*div), pe[:, 1::2]=cos(pos*div)
    pos = np.arange(L, dtype=np.float32)[:, None]
    div = np.exp(np.arange(0, H, 2, dtype=np.float32) * -(math.log(10000.0) / H))
    out = np.zeros((L, H), dtype=np.float32)
    out[:, 0::2] = np.sin(pos * div)
    out[:, 1::2] = np.cos(pos * div)
    return jnp.asarray(out)


def reference(session, conv_weight, conv_bias, pe):
    # Pure-JAX reference of the circular Conv1d (k=3, pad=1) + positional embedding.
    x_prev = jnp.roll(session, 1, axis=1)
    x_next = jnp.roll(session, -1, axis=1)
    return (
        jnp.einsum("blc,hc->blh", x_prev, conv_weight[:, :, 0])
        + jnp.einsum("blc,hc->blh", session, conv_weight[:, :, 1])
        + jnp.einsum("blc,hc->blh", x_next, conv_weight[:, :, 2])
        + conv_bias[None, None, :]
        + pe[None]
    )


# --------------------------------------------------------------------------- #
# Demo / self-check
# --------------------------------------------------------------------------- #
if __name__ == "__main__":
    B, L, C, H = 2, 8, 4, 32  # batch, seq, log_c, hidden_size
    open_position_embedding = True

    key = jax.random.PRNGKey(0)
    k_x, k_w, k_b = jax.random.split(key, 3)

    session = jax.random.normal(k_x, (B, L, C), jnp.float32)
    bound = 1.0 / math.sqrt(C * 3)                  # Conv1d default init bound
    conv_weight = jax.random.uniform(k_w, (H, C, 3), jnp.float32, -bound, bound)
    conv_bias = jax.random.uniform(k_b, (H,), jnp.float32, -bound, bound)
    pe = (make_positional_embedding(L, H) if open_position_embedding
          else jnp.zeros((L, H), jnp.float32))      # Return0 branch -> adds 0

    # 1) Strict f32 path (matches the PyTorch module within 1e-5).
    out = log_encoder_low(session, conv_weight, conv_bias, pe,
                          compute_dtype=jnp.float32)
    out = jax.block_until_ready(out)
    ref = reference(session, conv_weight, conv_bias, pe)
    np.testing.assert_allclose(np.asarray(out), np.asarray(ref), rtol=1e-5, atol=1e-5)

    # 2) Production path: bf16 HBM I/O + bf16 MXU operands, f32 accumulation.
    session_bf = session.astype(jnp.bfloat16)
    out_bf = log_encoder_low(session_bf, conv_weight, conv_bias, pe)
    out_bf = jax.block_until_ready(out_bf)
    ref_bf = reference(session_bf.astype(jnp.float32), conv_weight, conv_bias, pe)
    np.testing.assert_allclose(np.asarray(out_bf).astype(np.float32),
                               np.asarray(ref_bf), rtol=4e-2, atol=4e-2)

    # 3) Sequence-tiled path (circular halo from neighbor-tile views), strict f32.
    B2, L2 = 4, 32
    session2 = jax.random.normal(jax.random.PRNGKey(1), (B2, L2, C), jnp.float32)
    pe2 = make_positional_embedding(L2, H)
    out2 = log_encoder_low(session2, conv_weight, conv_bias, pe2,
                           compute_dtype=jnp.float32, block_batch=2, block_len=8)
    out2 = jax.block_until_ready(out2)
    ref2 = reference(session2, conv_weight, conv_bias, pe2)
    np.testing.assert_allclose(np.asarray(out2), np.asarray(ref2), rtol=1e-5, atol=1e-5)

    print("KERNEL_OK")
</pallas_src>

<mosaic_0001>
module attributes {stable_mosaic.version = 11 : i64} {
  func.func @kernel(%arg0: i32, %arg1: i32, %arg2: memref<1x8x4xf32, #tpu.memory_space<vmem>>, %arg3: memref<12x32xf32, #tpu.memory_space<vmem>>, %arg4: memref<2x128xf32, #tpu.memory_space<vmem>>, %arg5: memref<1x2x128xf32, #tpu.memory_space<vmem>>) attributes {dimension_semantics = [#tpu.dimension_semantics<parallel>, #tpu.dimension_semantics<parallel>], iteration_bounds = array<i64: 2, 1>, scalar_prefetch = 0 : i64, scratch_operands = 0 : i64, tpu.core_type = #tpu.core_type<tc>, window_params = [{transform_indices = @transform_0, window_bounds = array<i64: 1, 8, 4>}, {pipeline_mode = #tpu.pipeline_mode<synchronous>, transform_indices = @transform_1, window_bounds = array<i64: 12, 32>}, {transform_indices = @transform_2, window_bounds = array<i64: 2, 128>}, {transform_indices = @transform_3, window_bounds = array<i64: 1, 2, 128>}]} {
    %c0 = arith.constant 0 : index
    %c0_0 = arith.constant 0 : index
    %c0_1 = arith.constant 0 : index
    %0 = vector.load %arg2[%c0, %c0_0, %c0_1] : memref<1x8x4xf32, #tpu.memory_space<vmem>>, vector<1x8x4xf32>
    %1 = vector.extract_strided_slice %0 {offsets = [0, 7, 0], sizes = [1, 1, 4], strides = [1, 1, 1]} : vector<1x8x4xf32> to vector<1x1x4xf32>
    %2 = vector.extract_strided_slice %0 {offsets = [0, 0, 0], sizes = [1, 1, 4], strides = [1, 1, 1]} : vector<1x8x4xf32> to vector<1x1x4xf32>
    %3 = vector.extract_strided_slice %0 {offsets = [0, 0, 0], sizes = [1, 7, 4], strides = [1, 1, 1]} : vector<1x8x4xf32> to vector<1x7x4xf32>
    %4 = tpu.concatenate %1, %3 in 1 : vector<1x1x4xf32>, vector<1x7x4xf32> -> vector<1x8x4xf32>
    %5 = vector.extract_strided_slice %0 {offsets = [0, 1, 0], sizes = [1, 7, 4], strides = [1, 1, 1]} : vector<1x8x4xf32> to vector<1x7x4xf32>
    %6 = tpu.concatenate %5, %2 in 1 : vector<1x7x4xf32>, vector<1x1x4xf32> -> vector<1x8x4xf32>
    %7 = tpu.concatenate %4, %0, %6 in 2 : vector<1x8x4xf32>, vector<1x8x4xf32>, vector<1x8x4xf32> -> vector<1x8x12xf32>
    %8 = vector.shape_cast %7 : vector<1x8x12xf32> to vector<8x12xf32>
    %c0_2 = arith.constant 0 : index
    %c0_3 = arith.constant 0 : index
    %9 = vector.load %arg3[%c0_2, %c0_3] : memref<12x32xf32, #tpu.memory_space<vmem>>, vector<12x32xf32>
    %cst = arith.constant dense<0.000000e+00> : vector<8x32xf32>
    %10 = tpu.matmul %8, %9, %cst {dimension_numbers = #tpu.dot_dimension_numbers<[1], [0], [0], [1], [0, 0, 1, 1], [], []>} : vector<8x12xf32>, vector<12x32xf32>, vector<8x32xf32> -> vector<8x32xf32>
    %c0_4 = arith.constant 0 : index
    %c0_5 = arith.constant 0 : index
    %11 = vector.load %arg4[%c0_4, %c0_5] : memref<2x128xf32, #tpu.memory_space<vmem>>, vector<2x128xf32>
    %12 = vector.shape_cast %10 : vector<8x32xf32> to vector<1x2x128xf32>
    %13 = vector.shape_cast %11 : vector<2x128xf32> to vector<1x2x128xf32>
    %14 = arith.addf %12, %13 : vector<1x2x128xf32>
    %c0_6 = arith.constant 0 : index
    %c0_7 = arith.constant 0 : index
    %c0_8 = arith.constant 0 : index
    %15 = vector.load %arg5[%c0_6, %c0_7, %c0_8] : memref<1x2x128xf32, #tpu.memory_space<vmem>>, vector<1x2x128xf32>
    tpu.vector_store %arg5[%c0_6, %c0_7, %c0_8], %14 {strides = array<i32>} : memref<1x2x128xf32, #tpu.memory_space<vmem>>, vector<1x2x128xf32>,
    return
  }
  func.func @transform_0(%arg0: i32, %arg1: i32) -> (i32, i32, i32) {
    %c0_i32 = arith.constant 0 : i32
    %c0_i32_0 = arith.constant 0 : i32
    return %arg0, %arg1, %c0_i32 : i32, i32, i32
  }
  func.func @transform_1(%arg0: i32, %arg1: i32) -> (i32, i32) {
    %c0_i32 = arith.constant 0 : i32
    %c0_i32_0 = arith.constant 0 : i32
    %c0_i32_1 = arith.constant 0 : i32
    return %c0_i32, %c0_i32_0 : i32, i32
  }
  func.func @transform_2(%arg0: i32, %arg1: i32) -> (i32, i32) {
    %c0_i32 = arith.constant 0 : i32
    %c0_i32_0 = arith.constant 0 : i32
    return %arg1, %c0_i32 : i32, i32
  }
  func.func @transform_3(%arg0: i32, %arg1: i32) -> (i32, i32, i32) {
    %c0_i32 = arith.constant 0 : i32
    %c0_i32_0 = arith.constant 0 : i32
    return %arg0, %arg1, %c0_i32 : i32, i32, i32
  }
}

module attributes {stable_mosaic.version = 11 : i64} {
  func.func @kernel(%arg0: i32, %arg1: i32, %arg2: memref<1x8x4xf32, #tpu.memory_space<vmem>>, %arg3: memref<12x32xf32, #tpu.memory_space<vmem>>, %arg4: memref<8x32xf32, #tpu.memory_space<vmem>>, %arg5: memref<1x8x32xf32, #tpu.memory_space<vmem>>) attributes {dimension_semantics = [#tpu.dimension_semantics<parallel>, #tpu.dimension_semantics<parallel>], iteration_bounds = array<i64: 2, 1>, scalar_prefetch = 0 : i64, scratch_operands = 0 : i64, tpu.core_type = #tpu.core_type<tc>, window_params = [{transform_indices = @transform_0, window_bounds = array<i64: 1, 8, 4>}, {pipeline_mode = #tpu.pipeline_mode<synchronous>, transform_indices = @transform_1, window_bounds = array<i64: 12, 32>}, {transform_indices = @transform_2, window_bounds = array<i64: 8, 32>}, {transform_indices = @transform_3, window_bounds = array<i64: 1, 8, 32>}]} {
    %c0 = arith.constant 0 : index
    %c0_0 = arith.constant 0 : index
    %c0_1 = arith.constant 0 : index
    %0 = vector.load %arg2[%c0, %c0_0, %c0_1] : memref<1x8x4xf32, #tpu.memory_space<vmem>>, vector<1x8x4xf32>
    %1 = vector.extract_strided_slice %0 {offsets = [0, 7, 0], sizes = [1, 1, 4], strides = [1, 1, 1]} : vector<1x8x4xf32> to vector<1x1x4xf32>
    %2 = vector.extract_strided_slice %0 {offsets = [0, 0, 0], sizes = [1, 1, 4], strides = [1, 1, 1]} : vector<1x8x4xf32> to vector<1x1x4xf32>
    %3 = vector.extract_strided_slice %0 {offsets = [0, 0, 0], sizes = [1, 7, 4], strides = [1, 1, 1]} : vector<1x8x4xf32> to vector<1x7x4xf32>
    %4 = tpu.concatenate %1, %3 in 1 : vector<1x1x4xf32>, vector<1x7x4xf32> -> vector<1x8x4xf32>
    %5 = vector.extract_strided_slice %0 {offsets = [0, 1, 0], sizes = [1, 7, 4], strides = [1, 1, 1]} : vector<1x8x4xf32> to vector<1x7x4xf32>
    %6 = tpu.concatenate %5, %2 in 1 : vector<1x7x4xf32>, vector<1x1x4xf32> -> vector<1x8x4xf32>
    %7 = tpu.concatenate %4, %0, %6 in 2 : vector<1x8x4xf32>, vector<1x8x4xf32>, vector<1x8x4xf32> -> vector<1x8x12xf32>
    %8 = vector.shape_cast %7 : vector<1x8x12xf32> to vector<8x12xf32>
    %c0_2 = arith.constant 0 : index
    %c0_3 = arith.constant 0 : index
    %9 = vector.load %arg3[%c0_2, %c0_3] : memref<12x32xf32, #tpu.memory_space<vmem>>, vector<12x32xf32>
    %cst = arith.constant dense<0.000000e+00> : vector<8x32xf32>
    %10 = tpu.matmul %8, %9, %cst {dimension_numbers = #tpu.dot_dimension_numbers<[1], [0], [0], [1], [0, 0, 1, 1], [], []>} : vector<8x12xf32>, vector<12x32xf32>, vector<8x32xf32> -> vector<8x32xf32>
    %c0_4 = arith.constant 0 : index
    %c0_5 = arith.constant 0 : index
    %11 = vector.load %arg4[%c0_4, %c0_5] : memref<8x32xf32, #tpu.memory_space<vmem>>, vector<8x32xf32>
    %12 = vector.shape_cast %10 : vector<8x32xf32> to vector<1x8x32xf32>
    %13 = vector.shape_cast %11 : vector<8x32xf32> to vector<1x8x32xf32>
    %14 = arith.addf %12, %13 : vector<1x8x32xf32>
    %c0_6 = arith.constant 0 : index
    %c0_7 = arith.constant 0 : index
    %c0_8 = arith.constant 0 : index
    %15 = vector.load %arg5[%c0_6, %c0_7, %c0_8] : memref<1x8x32xf32, #tpu.memory_space<vmem>>, vector<1x8x32xf32>
    tpu.vector_store %arg5[%c0_6, %c0_7, %c0_8], %14 {strides = array<i32>} : memref<1x8x32xf32, #tpu.memory_space<vmem>>, vector<1x8x32xf32>,
    return
  }
  func.func @transform_0(%arg0: i32, %arg1: i32) -> (i32, i32, i32) {
    %c0_i32 = arith.constant 0 : i32
    %c0_i32_0 = arith.constant 0 : i32
    return %arg0, %arg1, %c0_i32 : i32, i32, i32
  }
  func.func @transform_1(%arg0: i32, %arg1: i32) -> (i32, i32) {
    %c0_i32 = arith.constant 0 : i32
    %c0_i32_0 = arith.constant 0 : i32
    %c0_i32_1 = arith.constant 0 : i32
    return %c0_i32, %c0_i32_0 : i32, i32
  }
  func.func @transform_2(%arg0: i32, %arg1: i32) -> (i32, i32) {
    %c0_i32 = arith.constant 0 : i32
    %c0_i32_0 = arith.constant 0 : i32
    return %arg1, %c0_i32 : i32, i32
  }
  func.func @transform_3(%arg0: i32, %arg1: i32) -> (i32, i32, i32) {
    %c0_i32 = arith.constant 0 : i32
    %c0_i32_0 = arith.constant 0 : i32
    return %arg0, %arg1, %c0_i32 : i32, i32, i32
  }
}

</mosaic_0001>

<llo_original>
// kernel: tpu_custom_call.1
$region0: #{tpu_custom_call.1}
  #allocation0 [shape = 'u32[]', space=smem, size = 0x4, offset = 0x4, fixed_abs, tag = 'smem constant byte address 0x4 - core index']
  #allocation1 [shape = 'u32[144,128]{1,0:T(1,128)}', space=vmem, size = 0x12000, scoped, tag = 'internal scratch']
  %s0 = inlined_call_operand.vmem [shape: f32[2,8,4], index: 0, kind: input, shape index: {}]
  %s1 = inlined_call_operand.vmem [shape: f32[12,32], index: 1, kind: input, shape index: {}]
  %s2 = inlined_call_operand.vmem [shape: f32[8,32], index: 2, kind: input, shape index: {}]
  %s3 = inlined_call_operand.hbm [shape: f32[2,8,32], index: 3, kind: output, shape index: {}]
  %s4 = sld [smem:[#allocation0]]
  $region45: #{tpu_custom_call.1} parent=0
    _
  %s6 = ssub.s32 1, %s4
  %s7 = scalar_select 0, %s6, %s4
  $region1: #{tpu_custom_call.1} parent=0
    #allocation2 [shape = 'u8[8192]{0}', space=vmem, size = 0x2000, scoped, tag = 'output window, operand 0']
    #allocation3 [shape = 's32[2]{0}', space=sflag, size = 0x8, scoped, tag = 'scoped memory for tpu_custom_call.1']
    %8 = vsyncpa [#allocation3], 0
    %s9 = scalar_lea.sflag [#allocation3], 1
    %10 = vsyncpa %s9, 0
    loop: start=0, step=1, limit=4
    $region2: #{tpu_custom_call.1} parent=1 // loop_pre_header
      _
    $region3: #{tpu_custom_call.1} parent=1 // loop_header
      %s12 = sphi 0, %s16
      %p13 = scmp.ge.s32.totalorder %s12, 4
      %s19 = sphi 0, %s31
      %s20 = sphi 0, %s27
      %s21 = sphi 0, %s19
      %s22 = sphi 0, %s20
      %s23 = sphi 0, %s21
      %s24 = sphi 0, %s22
      %s36 = sphi 0, %s38
      %s39 = sphi 0, %s36
      %s40 = sphi 0, %s39
      %s56 = sphi 0, %s40
      %s60 = sphi 0, %s60
      %s62 = sphi 0, %s60
      %s63 = sphi 0, %s62
      %s77 = sphi 0, %s63
      %s83 = sphi 0, %s85
      %s86 = sphi 0, %s83
      %s87 = sphi 0, %s86
      %s103 = sphi 0, %s87
      %s111 = sphi 0, %s113
      %s114 = sphi 0, %s111
      %s115 = sphi 0, %s114
      %s131 = sphi 0, %s115
    $region4: #{tpu_custom_call.1} parent=1 // loop_header_branch
      %15 = sbr.rel (%p13) target = $region8
    $region5: #{tpu_custom_call.1} parent=1 // loop_body
      %s17 = ssub.s32 %s12, 1
      %s18 = ssub.s32 %s12, 2
      %s25 = sadd.s32 1, %s20
      %p26 = scmp.ge.s32.totalorder %s25, 1
      %s27 = scalar_select %p26, 0, %s25
      %s28 = sadd.s32 1, %s19
      %s29 = scalar_select %p26, %s28, %s19
      %p30 = scmp.ge.s32.totalorder %s29, 2
      %s31 = scalar_select %p30, 0, %s29
      %s32 = ssub.s32 %s19, %s31
      %s33 = ssub.s32 %s20, %s27
      %s34 = sor.u32 %s32, %s33
      %p35 = scmp.eq.s32.totalorder %s34, 0
      %s37 = sadd.s32 %s36, 1
      %s38 = scalar_select %p35, %s36, %s37
      %p41 = pneg %p35
      %p42 = scmp.eq.s32.totalorder %s12, 1
      %p43 = por %p41, %p42
      %p44 = scmp.ne.s32.totalorder %s36, %s39
      %p45 = scmp.eq.s32.totalorder %s12, 0
      %p46 = por %p44, %p45
      %p47 = scmp.ne.s32.totalorder %s36, %s39
      %p48 = scmp.eq.s32.totalorder %s17, 1
      %p49 = por %p47, %p48
      %p50 = scmp.ne.s32.totalorder %s39, %s40
      %p51 = scmp.eq.s32.totalorder %s17, 0
      %p52 = por %p50, %p51
      %p53 = scmp.ne.s32.totalorder %s39, %s40
      %p54 = scmp.eq.s32.totalorder %s18, 1
      %p55 = por %p53, %p54
      %p57 = scmp.ne.s32.totalorder %s40, %s56
      %p58 = scmp.eq.s32.totalorder %s18, 0
      %p59 = por %p57, %p58
      %s61 = sadd.s32 %s60, 1
      %p64 = scmp.eq.s32.totalorder %s12, 1
      %p65 = scmp.ne.s32.totalorder %s60, %s62
      %p66 = scmp.eq.s32.totalorder %s12, 0
      %p67 = por %p65, %p66
      %p68 = scmp.ne.s32.totalorder %s60, %s62
      %p69 = scmp.eq.s32.totalorder %s17, 1
      %p70 = por %p68, %p69
      %p71 = scmp.ne.s32.totalorder %s62, %s63
      %p72 = scmp.eq.s32.totalorder %s17, 0
      %p73 = por %p71, %p72
      %p74 = scmp.ne.s32.totalorder %s62, %s63
      %p75 = scmp.eq.s32.totalorder %s18, 1
      %p76 = por %p74, %p75
      %p78 = scmp.ne.s32.totalorder %s63, %s77
      %p79 = scmp.eq.s32.totalorder %s18, 0
      %p80 = por %p78, %p79
      %s81 = ssub.s32 %s20, %s27
      %p82 = scmp.eq.s32.totalorder %s81, 0
      %s84 = sadd.s32 %s83, 1
      %s85 = scalar_select %p82, %s83, %s84
      %p88 = pneg %p82
      %p89 = scmp.eq.s32.totalorder %s12, 1
      %p90 = por %p88, %p89
      %p91 = scmp.ne.s32.totalorder %s83, %s86
      %p92 = scmp.eq.s32.totalorder %s12, 0
      %p93 = por %p91, %p92
      %p94 = scmp.ne.s32.totalorder %s83, %s86
      %p95 = scmp.eq.s32.totalorder %s17, 1
      %p96 = por %p94, %p95
      %p97 = scmp.ne.s32.totalorder %s86, %s87
      %p98 = scmp.eq.s32.totalorder %s17, 0
      %p99 = por %p97, %p98
      %p100 = scmp.ne.s32.totalorder %s86, %s87
      %p101 = scmp.eq.s32.totalorder %s18, 1
      %p102 = por %p100, %p101
      %p104 = scmp.ne.s32.totalorder %s87, %s103
      %p105 = scmp.eq.s32.totalorder %s18, 0
      %p106 = por %p104, %p105
      %s107 = ssub.s32 %s19, %s31
      %s108 = ssub.s32 %s20, %s27
      %s109 = sor.u32 %s107, %s108
      %p110 = scmp.eq.s32.totalorder %s109, 0
      %s112 = sadd.s32 %s111, 1
      %s113 = scalar_select %p110, %s111, %s112
      %p116 = pneg %p110
      %p117 = scmp.eq.s32.totalorder %s12, 1
      %p118 = por %p116, %p117
      %p119 = scmp.ne.s32.totalorder %s111, %s114
      %p120 = scmp.eq.s32.totalorder %s12, 0
      %p121 = por %p119, %p120
      %p122 = scmp.ne.s32.totalorder %s111, %s114
      %p123 = scmp.eq.s32.totalorder %s17, 1
      %p124 = por %p122, %p123
      %p125 = scmp.ne.s32.totalorder %s114, %s115
      %p126 = scmp.eq.s32.totalorder %s17, 0
      %p127 = por %p125, %p126
      %p128 = scmp.ne.s32.totalorder %s114, %s115
      %p129 = scmp.eq.s32.totalorder %s18, 1
      %p130 = por %p128, %p129
      %p132 = scmp.ne.s32.totalorder %s115, %s131
      %p133 = scmp.eq.s32.totalorder %s18, 0
      %p134 = por %p132, %p133
      %p135 = scmp.le.s32.totalorder 1, %s12
      %p136 = scmp.lt.s32.totalorder %s12, 3
      %p137 = pnand %p135, %p136
      %p138 = pneg %p137
      // Predicated region
      $region9: #{tpu_custom_call.1} parent=5 // pred_check
        _
      $region10: #{tpu_custom_call.1} parent=5 // pred_check_branch
        %140 = sbr.rel (%p137) target = $region12
      $region11: #{tpu_custom_call.1} parent=5 // pred_region
        %s141 = ssub.s32 %s12, 1
        // Predicated region
        $region13: #{tpu_custom_call.1} parent=11 // pred_check
          %p142 = pneg %p73
        $region14: #{tpu_custom_call.1} parent=11 // pred_check_branch
          %144 = sbr.rel (%p142) target = $region16
        $region15: #{tpu_custom_call.1} parent=11 // pred_region
          _
        $region16: #{tpu_custom_call.1} parent=11 // pred_fallthru
          _
        // Predicated region
        $region17: #{tpu_custom_call.1} parent=11 // pred_check
          %p145 = pneg %p99
        $region18: #{tpu_custom_call.1} parent=11 // pred_check_branch
          %147 = sbr.rel (%p145) target = $region20
        $region19: #{tpu_custom_call.1} parent=11 // pred_region
          %p148 = scmp.lt.s32.totalorder %s22, 0
          %s149 = scalar_select %p148, %s22, 0
          %s150 = smul.addr %s149, 8
          %s151 = scalar_lea.vmem %s2, %s150
        $region20: #{tpu_custom_call.1} parent=11 // pred_fallthru
          _
      $region12: #{tpu_custom_call.1} parent=5 // pred_fallthru
        _
      %p152 = scmp.lt.s32.totalorder %s12, 2
      // Predicated region
      $region21: #{tpu_custom_call.1} parent=5 // pred_check
        %p153 = pneg %p152
      $region22: #{tpu_custom_call.1} parent=5 // pred_check_branch
        %155 = sbr.rel (%p153) target = $region24
      $region23: #{tpu_custom_call.1} parent=5 // pred_region
        // Predicated region
        $region25: #{tpu_custom_call.1} parent=23 // pred_check
          %p156 = pneg %p46
        $region26: #{tpu_custom_call.1} parent=23 // pred_check_branch
          %158 = sbr.rel (%p156) target = $region28
        $region27: #{tpu_custom_call.1} parent=23 // pred_region
          %p159 = scmp.lt.s32.totalorder %s19, 1
          %s160 = scalar_select %p159, %s19, 1
          %p161 = scmp.lt.s32.totalorder %s20, 0
          %s162 = scalar_select %p161, %s20, 0
          %s163 = sadd.s32 %s162, %s160
          %s164 = smul.addr %s163, 8
          %s165 = scalar_lea.vmem %s0, %s164
        $region28: #{tpu_custom_call.1} parent=23 // pred_fallthru
          _
      $region24: #{tpu_custom_call.1} parent=5 // pred_fallthru
        _
      %p166 = scmp.le.s32.totalorder 1, %s12
      %p167 = scmp.lt.s32.totalorder %s12, 3
      %p168 = pnand %p166, %p167
      %p169 = pneg %p168
      // Predicated region
      $region29: #{tpu_custom_call.1} parent=5 // pred_check
        _
      $region30: #{tpu_custom_call.1} parent=5 // pred_check_branch
        %171 = sbr.rel (%p168) target = $region32
      $region31: #{tpu_custom_call.1} parent=5 // pred_region
        %s172 = ssub.s32 %s12, 1
        %p173 = scmp.lt.s32.totalorder %s21, 1
        %s174 = scalar_select %p173, %s21, 1
        %p175 = scmp.lt.s32.totalorder %s22, 0
        %s176 = scalar_select %p175, %s22, 0
        %s177 = sadd.s32 %s176, %s174
        %s178 = smul.addr %s177, 8
        %s179 = scalar_lea.vmem %s0, %s178
        %p180 = pneg %p52
        %p181 = pneg %p49
        %p182 = pneg %p73
        %p183 = pneg %p70
        %p184 = scmp.lt.s32.totalorder %s22, 0
        %s185 = scalar_select %p184, %s22, 0
        %s186 = smul.addr %s185, 8
        %s187 = scalar_lea.vmem %s2, %s186
        %p188 = pneg %p99
        %p189 = pneg %p96
        %p190 = pneg %p127
        %p191 = pneg %p124
        %s192 = sand.u32 %s114, 1
        %s193 = scalar_lea.sflag [#allocation3], %s192
        %s194 = sand.u32 %s114, 1
        %s195 = smul.addr %s194, 8
        %s196 = scalar_lea.vmem [#allocation2], %s195
        %p197 = scmp.lt.s32.totalorder %s21, 1
        %s198 = scalar_select %p197, %s21, 1
        %p199 = scmp.lt.s32.totalorder %s22, 0
        %s200 = scalar_select %p199, %s22, 0
        %s201 = sadd.s32 %s200, %s198
        %s202 = smul.addr %s201, 8
        %s203 = scalar_lea.vmem %s0, %s202
        %p204 = scmp.lt.s32.totalorder %s22, 0
        %s205 = scalar_select %p204, %s22, 0
        %s206 = smul.addr %s205, 8
        %s207 = scalar_lea.vmem %s2, %s206
        %v208 = vld [vmem:[%s203] sm:$0xff]
        %v210 = vrot.slane %v208, 7
        %vm212 = vcmask 1040384
        %v213 = vsel %vm212, %v210, %v210
        %v214 = vrot.slane %v208, 1
        %vm216 = vcmask 1046528
        %v217 = vsel %vm216, %v214, %v214
        %218 = vrot.lane.b32.xlu0 %v208, 4
        %v219 = vpop.permute.xlu0 %218
        %222 = vrot.lane.b32.xlu0 %v217, 8
        %v223 = vpop.permute.xlu0 %222
        %vm225 = vcmask 31744
        %v226 = vsel %vm225, %v213, %v219
        %vm227 = vcmask 64512
        %v228 = vsel %vm227, %v226, %v223
        %v229 = vld [vmem:[%s1] sm:$0xff]
        %v230 = vld [vmem:[%s1 + $0x8] sm:$0xf]
        %vm231 = vcmask 97280
        %v233 = vsel %vm231, %v228, 0
        %vm235 = vcmask 1043456
        %v237 = vsel %vm235, %v230, 0
        %239 = vmatprep.subr.mxu0 0.0
        %240 = vmatpush1.msra.mxu0 %v229
        %241 = vmatprep.subr.mxu0 0.0
        %242 = vmatpush1.msra.mxu0 %v237
        %243 = vmatprep.subr.mxu0 0.0
        %244 = vmatpush1.msra.mxu0 0.0
        %245 = vmatprep.subr.mxu0 0.0
        %246 = vmatpush1.msra.mxu0 0.0
        %247 = vmatprep.subr.mxu0 0.0
        %248 = vmatpush1.msra.mxu0 0.0
        %249 = vmatprep.subr.mxu0 0.0
        %250 = vmatpush1.msra.mxu0 0.0
        %251 = vmatprep.subr.mxu0 0.0
        %252 = vmatpush1.msra.mxu0 0.0
        %253 = vmatprep.subr.mxu0 0.0
        %254 = vmatpush1.msra.mxu0 0.0
        %255 = vmatprep.subr.mxu0 0.0
        %256 = vmatpush1.msra.mxu0 0.0
        %257 = vmatprep.subr.mxu0 0.0
        %258 = vmatpush1.msra.mxu0 0.0
        %259 = vmatprep.subr.mxu0 0.0
        %260 = vmatpush1.msra.mxu0 0.0
        %261 = vmatprep.subr.mxu0 0.0
        %262 = vmatpush1.msra.mxu0 0.0
        %263 = vmatprep.subr.mxu0 0.0
        %264 = vmatpush1.msra.mxu0 0.0
        %265 = vmatprep.subr.mxu0 0.0
        %266 = vmatpush1.msra.mxu0 0.0
        %267 = vmatprep.subr.mxu0 0.0
        %268 = vmatpush1.msra.mxu0 0.0
        %269 = vmatprep.subr.mxu0 0.0
        %270 = vmatpush1.msra.mxu0 0.0
        %271 = vmatprep.subr.mxu0 0.0
        %272 = vmatpush1.msra.mxu0 0.0
        %273 = vmatprep.subr.mxu0 0.0
        %274 = vmatpush1.msra.mxu0 0.0
        %275 = vmatprep.subr.mxu0 0.0
        %276 = vmatpush1.msra.mxu0 0.0
        %277 = vmatprep.subr.mxu0 0.0
        %278 = vmatpush1.msra.mxu0 0.0
        %279 = vmatprep.subr.mxu0 0.0
        %280 = vmatpush1.msra.mxu0 0.0
        %281 = vmatprep.subr.mxu0 0.0
        %282 = vmatpush1.msra.mxu0 0.0
        %283 = vmatprep.subr.mxu0 0.0
        %284 = vmatpush1.msra.mxu0 0.0
        %285 = vmatprep.subr.mxu0 0.0
        %286 = vmatpush1.msra.mxu0 0.0
        %287 = vmatprep.subr.mxu0 0.0
        %288 = vmatpush1.msra.mxu0 0.0
        %289 = vmatprep.subr.mxu0 0.0
        %290 = vmatpush1.msra.mxu0 0.0
        %291 = vmatprep.subr.mxu0 0.0
        %292 = vmatpush1.msra.mxu0 0.0
        %293 = vmatprep.subr.mxu0 0.0
        %294 = vmatpush1.msra.mxu0 0.0
        %295 = vmatprep.subr.mxu0 0.0
        %296 = vmatpush1.msra.mxu0 0.0
        %297 = vmatprep.subr.mxu0 0.0
        %298 = vmatpush1.msra.mxu0 0.0
        %299 = vmatprep.subr.mxu0 0.0
        %300 = vmatpush1.msra.mxu0 0.0
        %301 = vmatprep.subr.mxu0 0.0
        %302 = vmatpush1.msra.mxu0 0.0
        %303 = vmatprep.mubr.f32.mxu0 0.0
        %304 = vmatmul.mubr.f32.gmra.mrb[0].mxu0 %v233
        %v305 = vpop.f32.mrb[0].mxu0
        %v306 = vadd.f32 0.0, %v305
        %v307 = vpop.f32.mrb[0].mxu0
        %308 = vdwg.mxu0
        %v309 = vld [vmem:[%s207] sm:$0xff]
        %v310 = vadd.f32 %v306, %v309
        %vm311 = vcmask 261120
        %312 = vst.msk [vmem:[%s196] sm:$0xff] %vm311, %v310
        %s313 = sand.u32 %s114, 1
        %s314 = scalar_lea.sflag [#allocation3], %s313
        %s315 = sand.u32 %s114, 1
        %s316 = smul.addr %s315, 8
        %s317 = scalar_lea.vmem [#allocation2], %s316
        // Predicated region
        $region33: #{tpu_custom_call.1} parent=31 // pred_check
          %p318 = pneg %p124
        $region34: #{tpu_custom_call.1} parent=31 // pred_check_branch
          %320 = sbr.rel (%p318) target = $region36
        $region35: #{tpu_custom_call.1} parent=31 // pred_region
          %s322 = ssub.s32 128, 128
          %323 = vsyncadd %s314, %s322
          %s324 = sadd.s32 %s22, %s21
          %s325 = smul.addr %s324, 128
          %s326 = scalar_lea.hbm %s3, %s325
          %s328 = sshll.u32 %s317, 4
          %s329 = int_to_ptr.vmem [resolvable:$true] %s328
          %331 = dma.vmem_to_hbm [thread:$0]  %s329, 128, %s326, %s314
        $region36: #{tpu_custom_call.1} parent=31 // pred_fallthru
          _
      $region32: #{tpu_custom_call.1} parent=5 // pred_fallthru
        _
      %p332 = scmp.le.s32.totalorder 2, %s12
      // Predicated region
      $region37: #{tpu_custom_call.1} parent=5 // pred_check
        %p333 = pneg %p332
      $region38: #{tpu_custom_call.1} parent=5 // pred_check_branch
        %335 = sbr.rel (%p333) target = $region40
      $region39: #{tpu_custom_call.1} parent=5 // pred_region
        %s336 = ssub.s32 %s12, 2
        // Predicated region
        $region41: #{tpu_custom_call.1} parent=39 // pred_check
          %p337 = pneg %p130
        $region42: #{tpu_custom_call.1} parent=39 // pred_check_branch
          %339 = sbr.rel (%p337) target = $region44
        $region43: #{tpu_custom_call.1} parent=39 // pred_region
          %s340 = sand.u32 %s115, 1
          %s341 = scalar_lea.sflag [#allocation3], %s340
          %s342 = sand.u32 %s115, 1
          %s343 = smul.addr %s342, 8
          %s344 = scalar_lea.vmem [#allocation2], %s343
          %345 = dma.done %s341, 128
        $region44: #{tpu_custom_call.1} parent=39 // pred_fallthru
          _
      $region40: #{tpu_custom_call.1} parent=5 // pred_fallthru
        _
    $region6: #{tpu_custom_call.1} parent=1 // loop_footer
      %s16 = sadd.s32 1, %s12
    $region7: #{tpu_custom_call.1} parent=1 // loop_footer_branch
      %11 = sbr.rel target = $region3
    $region8: #{tpu_custom_call.1} parent=1 // loop_exit
      _
    %346 = vsyncpa [#allocation3], 1
    %s347 = scalar_lea.sflag [#allocation3], 1
    %348 = vsyncpa %s347, 1

</llo_original>
